<compile_context>
chip_gen: v5e
topology: v5e:2x2
jax: 0.10.0
libtpu: 0.0.40
codegen_flags: <defaults>
</compile_context>

<pallas_src>
import functools

import jax
import jax.numpy as jnp
from jax.experimental import pallas as pl
from jax.experimental.pallas import tpu as pltpu

_MIB = 1 << 20


def _round_up(a, m):
    return (a + m - 1) // m * m


@functools.lru_cache(maxsize=None)
def _vmem_capacity_bytes():
    """Per-core VMEM capacity; conservative 64 MiB (v7x) if query fails."""
    try:
        info = pltpu.get_tpu_info()
        cap = getattr(info, "vmem_capacity_bytes", None)
        if cap:
            return int(cap)
    except Exception:
        pass
    return 64 * _MIB


# ---------------------------------------------------------------------------
# Fused path: one whole sample (C, HW) per grid step (HW >= 128).
# ---------------------------------------------------------------------------
def _ln_fused_kernel(x_ref, g_ref, b_ref, o_ref, *, eps, n):
    # x_ref: (C, HW) for one sample; g_ref/b_ref: (C, 1).
    # ~5 VALU ops/element: sum add, x*x, sumsq add, scale mul, shift add.
    # Do not add per-element work here (v7x sits at the HBM/VALU crossover).
    x = x_ref[...].astype(jnp.float32)                  # (C, HW)
    s1 = jnp.sum(x, keepdims=True)                      # (1, 1)
    s2 = jnp.sum(x * x, keepdims=True)                  # (1, 1)
    mean = s1 * (1.0 / n)
    # torch .std() default is unbiased (ddof=1); one-pass form, clamped >= 0.
    var = jnp.maximum((s2 - n * mean * mean) * (1.0 / (n - 1.0)), 0.0)
    inv = pl.reciprocal(jnp.sqrt(var) + eps, approx=False)   # exact, once/sample
    scale = g_ref[...] * inv                            # (C, 1) sublane vector
    shift = b_ref[...] - mean * scale                   # (C, 1)
    o_ref[...] = (x * scale + shift).astype(o_ref.dtype)


def _layer_norm_fused(x3, gamma, beta, eps, usable_vmem):
    B, C, HW = x3.shape
    n = float(C * HW)
    g2 = gamma.reshape(C, 1).astype(jnp.float32)
    b2 = beta.reshape(C, 1).astype(jnp.float32)

    itemsize = jnp.dtype(x3.dtype).itemsize
    block_bytes = C * HW * itemsize
    # live VMEM ≈ 2x in + 2x out (double-buffered, input dtype)
    #           + ~2 full-tile f32 temps (upcast copy, x*x) + slack
    need = 4 * block_bytes + 8 * C * HW + 4 * _MIB
    vmem_limit = int(min(usable_vmem, max(32 * _MIB, need)))

    kernel = functools.partial(_ln_fused_kernel, eps=eps, n=n)
    return pl.pallas_call(
        kernel,
        out_shape=jax.ShapeDtypeStruct((B, C, HW), x3.dtype),
        grid_spec=pltpu.PrefetchScalarGridSpec(
            num_scalar_prefetch=0,
            grid=(B,),
            in_specs=[
                pl.BlockSpec((None, C, HW), lambda b: (b, 0, 0)),
                pl.BlockSpec((C, 1), lambda b: (0, 0)),
                pl.BlockSpec((C, 1), lambda b: (0, 0)),
            ],
            out_specs=pl.BlockSpec((None, C, HW), lambda b: (b, 0, 0)),
        ),
        compiler_params=pltpu.CompilerParams(
            dimension_semantics=("parallel",),
            vmem_limit_bytes=vmem_limit),
    )(x3, g2, b2)


# ---------------------------------------------------------------------------
# Lane-dense path: small-spatial inner U-Net layers (HW < 128, C up to 512).
# Each sample is flattened to a lane-dense (R, L) tile; gamma/beta are
# pre-expanded per element (tiny for these layers), so every store is an
# unmasked full-lane vst instead of an (HW<128)-lane masked one.
# ---------------------------------------------------------------------------
def _ln_dense_kernel(x_ref, g_ref, b_ref, o_ref, *, eps, n):
    x = x_ref[...].astype(jnp.float32)                  # (R, L), lane-dense
    s1 = jnp.sum(x, keepdims=True)
    s2 = jnp.sum(x * x, keepdims=True)
    mean = s1 * (1.0 / n)
    var = jnp.maximum((s2 - n * mean * mean) * (1.0 / (n - 1.0)), 0.0)
    inv = pl.reciprocal(jnp.sqrt(var) + eps, approx=False)
    scale = g_ref[...] * inv                            # per-element gamma
    shift = b_ref[...] - mean * scale
    o_ref[...] = (x * scale + shift).astype(o_ref.dtype)


def _choose_lane_width(np_):
    for lane in (4096, 2048, 1024, 512, 256, 128):
        if np_ % lane == 0 and np_ // lane >= 8:
            return lane
    return 128


def _layer_norm_dense(x3, gamma, beta, eps, usable_vmem):
    B, C, HW = x3.shape
    N = C * HW
    n = float(N)
    Np = _round_up(N, 128)          # zero-pad: does not perturb sum / sumsq
    L = _choose_lane_width(Np)
    R = Np // L

    xf = x3.reshape(B, N)
    gf = jnp.broadcast_to(gamma.astype(jnp.float32)[:, None], (C, HW)).reshape(N)
    bf = jnp.broadcast_to(beta.astype(jnp.float32)[:, None], (C, HW)).reshape(N)
    if Np != N:
        xf = jnp.pad(xf, ((0, 0), (0, Np - N)))
        gf = jnp.pad(gf, (0, Np - N))
        bf = jnp.pad(bf, (0, Np - N))
    xr = xf.reshape(B, R, L)
    g2 = gf.reshape(R, L)
    b2 = bf.reshape(R, L)

    need = 4 * Np * jnp.dtype(x3.dtype).itemsize + 16 * Np + 4 * _MIB
    vmem_limit = int(min(usable_vmem, max(32 * _MIB, need)))

    kernel = functools.partial(_ln_dense_kernel, eps=eps, n=n)
    outr = pl.pallas_call(
        kernel,
        out_shape=jax.ShapeDtypeStruct((B, R, L), x3.dtype),
        grid_spec=pltpu.PrefetchScalarGridSpec(
            num_scalar_prefetch=0,
            grid=(B,),
            in_specs=[
                pl.BlockSpec((None, R, L), lambda b: (b, 0, 0)),
                pl.BlockSpec((R, L), lambda b: (0, 0)),
                pl.BlockSpec((R, L), lambda b: (0, 0)),
            ],
            out_specs=pl.BlockSpec((None, R, L), lambda b: (b, 0, 0)),
        ),
        compiler_params=pltpu.CompilerParams(
            dimension_semantics=("parallel",),
            vmem_limit_bytes=vmem_limit),
    )(xr, g2, b2)
    return outr.reshape(B, Np)[:, :N].reshape(B, C, HW)


# ---------------------------------------------------------------------------
# Tiled two-pass path: grid=(B, HW//TILE), both axes 'parallel'.
# Pass 1 emits per-tile partial sums; a tiny host-side reduce combines them;
# pass 2 computes scale/shift in-kernel and applies the affine.
# ---------------------------------------------------------------------------
def _stats_kernel(x_ref, s1_ref, s2_ref):
    # x_ref: (C, T); s1/s2: (1, 1) per-(sample, tile) partial sums.
    x = x_ref[...].astype(jnp.float32)
    s1_ref[...] = jnp.sum(x, keepdims=True)
    s2_ref[...] = jnp.sum(x * x, keepdims=True)


def _affine_kernel(x_ref, s1_ref, s2_ref, g_ref, b_ref, o_ref, *, eps, n):
    # Per-sample scale/shift recomputed per tile: O(C) work, negligible vs the
    # O(C*T) elementwise epilogue, and it keeps both grid axes 'parallel'.
    mean = s1_ref[...] * (1.0 / n)                                  # (1, 1)
    var = jnp.maximum((s2_ref[...] - n * mean * mean) * (1.0 / (n - 1.0)), 0.0)
    inv = pl.reciprocal(jnp.sqrt(var) + eps, approx=False)          # (1, 1)
    scale = g_ref[...] * inv                                        # (C, 1)
    shift = b_ref[...] - mean * scale                               # (C, 1)
    x = x_ref[...].astype(jnp.float32)
    o_ref[...] = (x * scale + shift).astype(o_ref.dtype)


def _choose_tile_hw(HWp, C, itemsize, budget_bytes):
    """Largest multiple-of-128 divisor of HWp whose (C, tile) block fits."""
    for m in range(HWp // 128, 0, -1):
        t = m * 128
        if HWp % t == 0 and C * t * itemsize <= budget_bytes:
            return t
    return 128


def _layer_norm_tiled(x3, gamma, beta, eps, usable_vmem, tile_hw=None,
                      tile_budget_bytes=4 * _MIB):
    B, C, HW = x3.shape
    n = float(C * HW)
    itemsize = jnp.dtype(x3.dtype).itemsize

    # Ragged HW: zero-pad to a multiple of 128 (zeros do not perturb the
    # sums; n stays the true C*HW) and slice the pad off afterwards.
    HWp = _round_up(HW, 128)
    x3p = x3 if HWp == HW else jnp.pad(x3, ((0, 0), (0, 0), (0, HWp - HW)))

    if tile_hw is None:
        tile_hw = _choose_tile_hw(HWp, C, itemsize, tile_budget_bytes)
    assert HWp % tile_hw == 0 and tile_hw % 128 == 0
    nk = HWp // tile_hw

    tile_bytes = C * tile_hw * itemsize
    need = 4 * tile_bytes + 8 * C * tile_hw + 4 * _MIB
    vmem_limit = int(min(usable_vmem, max(32 * _MIB, need)))

    g2 = gamma.reshape(C, 1).astype(jnp.float32)
    b2 = beta.reshape(C, 1).astype(jnp.float32)

    # Pass 1: per-tile partial sums ('parallel' x 'parallel' -> both v7x
    # TensorCores share the work even when B == 1).
    s1p, s2p = pl.pallas_call(
        _stats_kernel,
        out_shape=(jax.ShapeDtypeStruct((B, nk, 1, 1), jnp.float32),
                   jax.ShapeDtypeStruct((B, nk, 1, 1), jnp.float32)),
        grid_spec=pltpu.PrefetchScalarGridSpec(
            num_scalar_prefetch=0,
            grid=(B, nk),
            in_specs=[pl.BlockSpec((None, C, tile_hw), lambda b, k: (b, 0, k))],
            out_specs=(
                pl.BlockSpec((None, None, 1, 1), lambda b, k: (b, k, 0, 0)),
                pl.BlockSpec((None, None, 1, 1), lambda b, k: (b, k, 0, 0)),
            ),
        ),
        compiler_params=pltpu.CompilerParams(
            dimension_semantics=("parallel", "parallel"),
            vmem_limit_bytes=vmem_limit),
    )(x3p)

    # Tiny cross-tile combine (B*nk f32 scalars). The per-channel scale/shift
    # math is folded into the affine kernel (no (B, C) HBM round trip).
    s1 = jnp.sum(s1p.reshape(B, nk), axis=1).reshape(B, 1, 1)
    s2 = jnp.sum(s2p.reshape(B, nk), axis=1).reshape(B, 1, 1)

    kernel = functools.partial(_affine_kernel, eps=eps, n=n)
    out3p = pl.pallas_call(
        kernel,
        out_shape=jax.ShapeDtypeStruct((B, C, HWp), x3.dtype),
        grid_spec=pltpu.PrefetchScalarGridSpec(
            num_scalar_prefetch=0,
            grid=(B, nk),
            in_specs=[
                pl.BlockSpec((None, C, tile_hw), lambda b, k: (b, 0, k)),
                pl.BlockSpec((None, 1, 1), lambda b, k: (b, 0, 0)),
                pl.BlockSpec((None, 1, 1), lambda b, k: (b, 0, 0)),
                pl.BlockSpec((C, 1), lambda b, k: (0, 0)),
                pl.BlockSpec((C, 1), lambda b, k: (0, 0)),
            ],
            out_specs=pl.BlockSpec((None, C, tile_hw), lambda b, k: (b, 0, k)),
        ),
        compiler_params=pltpu.CompilerParams(
            dimension_semantics=("parallel", "parallel"),
            vmem_limit_bytes=vmem_limit),
    )(x3p, s1, s2, g2, b2)

    return out3p if HWp == HW else out3p[:, :, :HW]


# ---------------------------------------------------------------------------
# Wrapper
# ---------------------------------------------------------------------------
def layer_norm_pallas(x, gamma, beta, eps=1e-5, *, force_path=None, tile_hw=None):
    """x: (B, C, H, W) NCHW. gamma, beta: (C,). Returns (B, C, H, W).

    torch semantics: per-sample normalization over (C, H, W), unbiased std,
    eps added to the std, per-channel affine.
    """
    B, C, H, W = x.shape
    HW = H * W
    x3 = x.reshape(B, C, HW)
    itemsize = jnp.dtype(x.dtype).itemsize
    block_bytes = C * HW * itemsize

    vmem_cap = _vmem_capacity_bytes()
    usable = max(vmem_cap - 16 * _MIB, 24 * _MIB)        # leave compiler headroom
    # Fused-path live VMEM per sample: 2x in + 2x out (input dtype) + ~2 f32
    # temps -> generation-aware fused budget (≈8 MiB v7x, ≈18 MiB v5e/v6e f32).
    fused_live_factor = 4 + 8 // itemsize                # f32: 6x, bf16: 8x
    max_fused_block_bytes = usable // fused_live_factor
    # v7x (2 TensorCores) shares work only along 'parallel' grid axes; with
    # B == 1 the fused grid=(B,) path idles one core -> prefer the tiled path.
    two_tc_likely = vmem_cap <= 96 * _MIB
    prefer_tiled_b1 = two_tc_likely and B == 1 and block_bytes > 2 * _MIB

    if force_path == "fused":
        out3 = _layer_norm_fused(x3, gamma, beta, eps, usable)
    elif force_path == "tiled":
        out3 = _layer_norm_tiled(x3, gamma, beta, eps, usable, tile_hw=tile_hw)
    elif force_path == "dense" or HW < 128:
        out3 = _layer_norm_dense(x3, gamma, beta, eps, usable)
    elif block_bytes <= max_fused_block_bytes and not prefer_tiled_b1:
        out3 = _layer_norm_fused(x3, gamma, beta, eps, usable)
    else:
        out3 = _layer_norm_tiled(x3, gamma, beta, eps, usable, tile_hw=tile_hw)
    return out3.reshape(B, C, H, W)


# ---------------------------------------------------------------------------
# Pure-JAX reference (torch semantics: per-sample norm, ddof=1, eps on std)
# ---------------------------------------------------------------------------
def layer_norm_ref(x, gamma, beta, eps=1e-5):
    B = x.shape[0]
    xf = x.reshape(B, -1).astype(jnp.float32)
    mean = xf.mean(axis=1).reshape(B, 1, 1, 1)
    std = jnp.sqrt(xf.var(axis=1, ddof=1)).reshape(B, 1, 1, 1)
    y = (x.astype(jnp.float32) - mean) / (std + eps)
    y = y * gamma.reshape(1, -1, 1, 1) + beta.reshape(1, -1, 1, 1)
    return y.astype(x.dtype)


if __name__ == "__main__":
    key = jax.random.PRNGKey(0)
    ks = jax.random.split(key, 8)

    def check(name, x, gamma, beta, **kw):
        out = jax.block_until_ready(layer_norm_pallas(x, gamma, beta, eps=1e-5, **kw))
        ref = layer_norm_ref(x, gamma, beta, eps=1e-5)
        assert out.shape == x.shape, name
        assert jnp.allclose(out, ref, atol=1e-4, rtol=1e-4), f"{name} mismatch"

    # 1) fused whole-sample path (HW >= 128, fits the fused budget).
    x = jax.random.normal(ks[0], (2, 4, 16, 16), dtype=jnp.float32)
    g4 = jax.random.uniform(ks[1], (4,), dtype=jnp.float32)
    b4 = jnp.zeros((4,), dtype=jnp.float32)
    check("fused", x, g4, b4)

    # 2) tiled two-pass path (forced; tile 128 -> 2 HW chunks).
    g8 = jax.random.uniform(ks[3], (8,), dtype=jnp.float32)
    b8 = jnp.full((8,), 0.1, dtype=jnp.float32)
    x = jax.random.normal(ks[2], (2, 8, 16, 16), dtype=jnp.float32)
    check("tiled", x, g8, b8, force_path="tiled", tile_hw=128)

    # 3) tiled path with ragged HW (144 -> zero-padded to 256).
    x = jax.random.normal(ks[4], (2, 8, 12, 12), dtype=jnp.float32)
    check("tiled-padded", x, g8, b8, force_path="tiled", tile_hw=128)

    # 4) lane-dense path (inner U-Net layers: HW < 128, C large).
    x = jax.random.normal(ks[5], (2, 256, 4, 4), dtype=jnp.float32)
    g256 = jax.random.uniform(ks[6], (256,), dtype=jnp.float32)
    b256 = jnp.full((256,), -0.05, dtype=jnp.float32)
    check("dense", x, g256, b256)

    # 5) lane-dense path with C*HW padding (150 -> 256) and B == 1.
    x = jax.random.normal(ks[7], (1, 6, 5, 5), dtype=jnp.float32)
    g6 = jnp.linspace(0.5, 1.5, 6, dtype=jnp.float32)
    b6 = jnp.linspace(-0.2, 0.2, 6, dtype=jnp.float32)
    check("dense-padded", x, g6, b6)

    print("KERNEL_OK")
</pallas_src>

<mosaic_0001>
module attributes {stable_mosaic.version = 11 : i64} {
  func.func @_ln_fused_kernel(%arg0: i32, %arg1: memref<1x4x256xf32, #tpu.memory_space<vmem>>, %arg2: memref<4x1xf32, #tpu.memory_space<vmem>>, %arg3: memref<4x1xf32, #tpu.memory_space<vmem>>, %arg4: memref<1x4x256xf32, #tpu.memory_space<vmem>>) attributes {dimension_semantics = [#tpu.dimension_semantics<parallel>], iteration_bounds = array<i64: 2>, scalar_prefetch = 0 : i64, scratch_operands = 0 : i64, tpu.core_type = #tpu.core_type<tc>, window_params = [{transform_indices = @transform_0, window_bounds = array<i64: 1, 4, 256>}, {pipeline_mode = #tpu.pipeline_mode<synchronous>, transform_indices = @transform_1, window_bounds = array<i64: 4, 1>}, {pipeline_mode = #tpu.pipeline_mode<synchronous>, transform_indices = @transform_2, window_bounds = array<i64: 4, 1>}, {transform_indices = @transform_3, window_bounds = array<i64: 1, 4, 256>}]} {
    %c0 = arith.constant 0 : index
    %c0_0 = arith.constant 0 : index
    %c0_1 = arith.constant 0 : index
    %0 = vector.load %arg1[%c0, %c0_0, %c0_1] : memref<1x4x256xf32, #tpu.memory_space<vmem>>, vector<1x4x256xf32>
    %1 = vector.shape_cast %0 : vector<1x4x256xf32> to vector<4x256xf32>
    %2 = vector.shape_cast %1 : vector<4x256xf32> to vector<1x4x256xf32>
    %cst = arith.constant dense<0.000000e+00> : vector<1xf32>
    %3 = vector.multi_reduction <add>, %2, %cst [1, 2] : vector<1x4x256xf32> to vector<1xf32>
    %4 = vector.shape_cast %3 : vector<1xf32> to vector<1x1x1xf32>
    %5 = vector.extract %4[0, 0, 0] : f32 from vector<1x1x1xf32>
    %6 = vector.broadcast %5 : f32 to vector<1x1xf32>
    %7 = arith.mulf %1, %1 : vector<4x256xf32>
    %8 = vector.shape_cast %7 : vector<4x256xf32> to vector<1x4x256xf32>
    %cst_2 = arith.constant dense<0.000000e+00> : vector<1xf32>
    %9 = vector.multi_reduction <add>, %8, %cst_2 [1, 2] : vector<1x4x256xf32> to vector<1xf32>
    %10 = vector.shape_cast %9 : vector<1xf32> to vector<1x1x1xf32>
    %11 = vector.extract %10[0, 0, 0] : f32 from vector<1x1x1xf32>
    %12 = vector.broadcast %11 : f32 to vector<1x1xf32>
    %cst_3 = arith.constant 9.765625E-4 : f32
    %13 = vector.broadcast %cst_3 : f32 to vector<1x1xf32>
    %14 = arith.mulf %6, %13 : vector<1x1xf32>
    %cst_4 = arith.constant 1.024000e+03 : f32
    %15 = vector.broadcast %cst_4 : f32 to vector<1x1xf32>
    %16 = arith.mulf %15, %14 : vector<1x1xf32>
    %17 = arith.mulf %16, %14 : vector<1x1xf32>
    %18 = arith.subf %12, %17 : vector<1x1xf32>
    %cst_5 = arith.constant 9.77517105E-4 : f32
    %19 = vector.broadcast %cst_5 : f32 to vector<1x1xf32>
    %20 = arith.mulf %18, %19 : vector<1x1xf32>
    %cst_6 = arith.constant 0.000000e+00 : f32
    %21 = vector.broadcast %cst_6 : f32 to vector<1x1xf32>
    %22 = arith.maximumf %20, %21 : vector<1x1xf32>
    %23 = math.sqrt %22 : vector<1x1xf32>
    %cst_7 = arith.constant 9.99999974E-6 : f32
    %24 = vector.broadcast %cst_7 : f32 to vector<1x1xf32>
    %25 = arith.addf %23, %24 : vector<1x1xf32>
    %26 = tpu.reciprocal %25 : vector<1x1xf32> -> vector<1x1xf32>
    %c0_8 = arith.constant 0 : index
    %c0_9 = arith.constant 0 : index
    %27 = vector.load %arg2[%c0_8, %c0_9] : memref<4x1xf32, #tpu.memory_space<vmem>>, vector<4x1xf32>
    %28 = vector.broadcast %26 : vector<1x1xf32> to vector<4x1xf32>
    %29 = arith.mulf %27, %28 : vector<4x1xf32>
    %c0_10 = arith.constant 0 : index
    %c0_11 = arith.constant 0 : index
    %30 = vector.load %arg3[%c0_10, %c0_11] : memref<4x1xf32, #tpu.memory_space<vmem>>, vector<4x1xf32>
    %31 = vector.broadcast %14 : vector<1x1xf32> to vector<4x1xf32>
    %32 = arith.mulf %31, %29 : vector<4x1xf32>
    %33 = arith.subf %30, %32 : vector<4x1xf32>
    %34 = vector.broadcast %29 : vector<4x1xf32> to vector<4x256xf32>
    %35 = arith.mulf %1, %34 : vector<4x256xf32>
    %36 = vector.broadcast %33 : vector<4x1xf32> to vector<4x256xf32>
    %37 = arith.addf %35, %36 : vector<4x256xf32>
    %c0_12 = arith.constant 0 : index
    %c0_13 = arith.constant 0 : index
    %c0_14 = arith.constant 0 : index
    %38 = vector.load %arg4[%c0_12, %c0_13, %c0_14] : memref<1x4x256xf32, #tpu.memory_space<vmem>>, vector<1x4x256xf32>
    %39 = vector.shape_cast %38 : vector<1x4x256xf32> to vector<4x256xf32>
    %40 = vector.shape_cast %37 : vector<4x256xf32> to vector<1x4x256xf32>
    tpu.vector_store %arg4[%c0_12, %c0_13, %c0_14], %40 {strides = array<i32>} : memref<1x4x256xf32, #tpu.memory_space<vmem>>, vector<1x4x256xf32>,
    return
  }
  func.func @transform_0(%arg0: i32) -> (i32, i32, i32) {
    %c0_i32 = arith.constant 0 : i32
    %c0_i32_0 = arith.constant 0 : i32
    %c0_i32_1 = arith.constant 0 : i32
    return %arg0, %c0_i32, %c0_i32_0 : i32, i32, i32
  }
  func.func @transform_1(%arg0: i32) -> (i32, i32) {
    %c0_i32 = arith.constant 0 : i32
    %c0_i32_0 = arith.constant 0 : i32
    %c0_i32_1 = arith.constant 0 : i32
    return %c0_i32, %c0_i32_0 : i32, i32
  }
  func.func @transform_2(%arg0: i32) -> (i32, i32) {
    %c0_i32 = arith.constant 0 : i32
    %c0_i32_0 = arith.constant 0 : i32
    %c0_i32_1 = arith.constant 0 : i32
    return %c0_i32, %c0_i32_0 : i32, i32
  }
  func.func @transform_3(%arg0: i32) -> (i32, i32, i32) {
    %c0_i32 = arith.constant 0 : i32
    %c0_i32_0 = arith.constant 0 : i32
    %c0_i32_1 = arith.constant 0 : i32
    return %arg0, %c0_i32, %c0_i32_0 : i32, i32, i32
  }
}

</mosaic_0001>

<llo_original>
// kernel: tpu_custom_call.1
$region0: #{tpu_custom_call.1}
  #allocation0 [shape = 'u32[]', space=smem, size = 0x4, offset = 0x4, fixed_abs, tag = 'smem constant byte address 0x4 - core index']
  #allocation1 [shape = 'u32[72,128]{1,0:T(1,128)}', space=vmem, size = 0x9000, scoped, tag = 'internal scratch']
  %s0 = inlined_call_operand.hbm [shape: f32[2,4,256], index: 0, kind: input, shape index: {}]
  %s1 = inlined_call_operand.vmem [shape: f32[4,1], index: 1, kind: input, shape index: {}]
  %s2 = inlined_call_operand.vmem [shape: f32[4,1], index: 2, kind: input, shape index: {}]
  %s3 = inlined_call_operand.hbm [shape: f32[2,4,256], index: 3, kind: output, shape index: {}]
  %s4 = sld [smem:[#allocation0]]
  $region49: #{tpu_custom_call.1} parent=0
    _
  %s6 = ssub.s32 1, %s4
  %s7 = scalar_select 0, %s6, %s4
  $region1: #{tpu_custom_call.1} parent=0
    #allocation2 [shape = 'u8[8192]{0}', space=vmem, size = 0x2000, scoped, tag = 'input window, operand 0']
    #allocation3 [shape = 's32[2]{0}', space=sflag, size = 0x8, scoped, tag = 'scoped memory for tpu_custom_call.1']
    #allocation4 [shape = 's32[2]{0}', space=sflag, size = 0x8, scoped, tag = 'scoped memory for tpu_custom_call.1']
    #allocation5 [shape = 'u8[8192]{0}', space=vmem, size = 0x2000, scoped, tag = 'output window, operand 0']
    %8 = vsyncpa [#allocation3], 0
    %s9 = scalar_lea.sflag [#allocation3], 1
    %10 = vsyncpa %s9, 0
    %11 = vsyncpa [#allocation4], 0
    %s12 = scalar_lea.sflag [#allocation4], 1
    %13 = vsyncpa %s12, 0
    loop: start=0, step=1, limit=4
    $region2: #{tpu_custom_call.1} parent=1 // loop_pre_header
      _
    $region3: #{tpu_custom_call.1} parent=1 // loop_header
      %s15 = sphi 0, %s19
      %p16 = scmp.ge.s32.totalorder %s15, 4
      %s25 = sphi 0, %s27
      %s28 = sphi 0, %s25
      %s29 = sphi 0, %s28
      %s45 = sphi 0, %s29
      %s49 = sphi 0, %s49
      %s51 = sphi 0, %s49
      %s52 = sphi 0, %s51
      %s66 = sphi 0, %s52
      %s70 = sphi 0, %s70
      %s72 = sphi 0, %s70
      %s73 = sphi 0, %s72
      %s87 = sphi 0, %s73
      %s93 = sphi 0, %s95
      %s96 = sphi 0, %s93
      %s97 = sphi 0, %s96
      %s113 = sphi 0, %s97
    $region4: #{tpu_custom_call.1} parent=1 // loop_header_branch
      %18 = sbr.rel (%p16) target = $region8
    $region5: #{tpu_custom_call.1} parent=1 // loop_body
      %s20 = ssub.s32 %s15, 1
      %s21 = ssub.s32 %s15, 2
      %s22 = sadd.s32 %s15, 1
      %s23 = ssub.s32 %s15, %s22
      %p24 = scmp.eq.s32.totalorder %s23, 0
      %s26 = sadd.s32 %s25, 1
      %s27 = scalar_select %p24, %s25, %s26
      %p30 = pneg %p24
      %p31 = scmp.eq.s32.totalorder %s15, 1
      %p32 = por %p30, %p31
      %p33 = scmp.ne.s32.totalorder %s25, %s28
      %p34 = scmp.eq.s32.totalorder %s15, 0
      %p35 = por %p33, %p34
      %p36 = scmp.ne.s32.totalorder %s25, %s28
      %p37 = scmp.eq.s32.totalorder %s20, 1
      %p38 = por %p36, %p37
      %p39 = scmp.ne.s32.totalorder %s28, %s29
      %p40 = scmp.eq.s32.totalorder %s20, 0
      %p41 = por %p39, %p40
      %p42 = scmp.ne.s32.totalorder %s28, %s29
      %p43 = scmp.eq.s32.totalorder %s21, 1
      %p44 = por %p42, %p43
      %p46 = scmp.ne.s32.totalorder %s29, %s45
      %p47 = scmp.eq.s32.totalorder %s21, 0
      %p48 = por %p46, %p47
      %s50 = sadd.s32 %s49, 1
      %p53 = scmp.eq.s32.totalorder %s15, 1
      %p54 = scmp.ne.s32.totalorder %s49, %s51
      %p55 = scmp.eq.s32.totalorder %s15, 0
      %p56 = por %p54, %p55
      %p57 = scmp.ne.s32.totalorder %s49, %s51
      %p58 = scmp.eq.s32.totalorder %s20, 1
      %p59 = por %p57, %p58
      %p60 = scmp.ne.s32.totalorder %s51, %s52
      %p61 = scmp.eq.s32.totalorder %s20, 0
      %p62 = por %p60, %p61
      %p63 = scmp.ne.s32.totalorder %s51, %s52
      %p64 = scmp.eq.s32.totalorder %s21, 1
      %p65 = por %p63, %p64
      %p67 = scmp.ne.s32.totalorder %s52, %s66
      %p68 = scmp.eq.s32.totalorder %s21, 0
      %p69 = por %p67, %p68
      %s71 = sadd.s32 %s70, 1
      %p74 = scmp.eq.s32.totalorder %s15, 1
      %p75 = scmp.ne.s32.totalorder %s70, %s72
      %p76 = scmp.eq.s32.totalorder %s15, 0
      %p77 = por %p75, %p76
      %p78 = scmp.ne.s32.totalorder %s70, %s72
      %p79 = scmp.eq.s32.totalorder %s20, 1
      %p80 = por %p78, %p79
      %p81 = scmp.ne.s32.totalorder %s72, %s73
      %p82 = scmp.eq.s32.totalorder %s20, 0
      %p83 = por %p81, %p82
      %p84 = scmp.ne.s32.totalorder %s72, %s73
      %p85 = scmp.eq.s32.totalorder %s21, 1
      %p86 = por %p84, %p85
      %p88 = scmp.ne.s32.totalorder %s73, %s87
      %p89 = scmp.eq.s32.totalorder %s21, 0
      %p90 = por %p88, %p89
      %s91 = ssub.s32 %s15, %s22
      %p92 = scmp.eq.s32.totalorder %s91, 0
      %s94 = sadd.s32 %s93, 1
      %s95 = scalar_select %p92, %s93, %s94
      %p98 = pneg %p92
      %p99 = scmp.eq.s32.totalorder %s15, 1
      %p100 = por %p98, %p99
      %p101 = scmp.ne.s32.totalorder %s93, %s96
      %p102 = scmp.eq.s32.totalorder %s15, 0
      %p103 = por %p101, %p102
      %p104 = scmp.ne.s32.totalorder %s93, %s96
      %p105 = scmp.eq.s32.totalorder %s20, 1
      %p106 = por %p104, %p105
      %p107 = scmp.ne.s32.totalorder %s96, %s97
      %p108 = scmp.eq.s32.totalorder %s20, 0
      %p109 = por %p107, %p108
      %p110 = scmp.ne.s32.totalorder %s96, %s97
      %p111 = scmp.eq.s32.totalorder %s21, 1
      %p112 = por %p110, %p111
      %p114 = scmp.ne.s32.totalorder %s97, %s113
      %p115 = scmp.eq.s32.totalorder %s21, 0
      %p116 = por %p114, %p115
      %p117 = scmp.le.s32.totalorder 1, %s15
      %p118 = scmp.lt.s32.totalorder %s15, 3
      %p119 = pnand %p117, %p118
      %p120 = pneg %p119
      // Predicated region
      $region9: #{tpu_custom_call.1} parent=5 // pred_check
        _
      $region10: #{tpu_custom_call.1} parent=5 // pred_check_branch
        %122 = sbr.rel (%p119) target = $region12
      $region11: #{tpu_custom_call.1} parent=5 // pred_region
        %s123 = ssub.s32 %s15, 1
        // Predicated region
        $region13: #{tpu_custom_call.1} parent=11 // pred_check
          %p124 = pneg %p62
        $region14: #{tpu_custom_call.1} parent=11 // pred_check_branch
          %126 = sbr.rel (%p124) target = $region16
        $region15: #{tpu_custom_call.1} parent=11 // pred_region
          _
        $region16: #{tpu_custom_call.1} parent=11 // pred_fallthru
          _
        // Predicated region
        $region17: #{tpu_custom_call.1} parent=11 // pred_check
          %p127 = pneg %p83
        $region18: #{tpu_custom_call.1} parent=11 // pred_check_branch
          %129 = sbr.rel (%p127) target = $region20
        $region19: #{tpu_custom_call.1} parent=11 // pred_region
          _
        $region20: #{tpu_custom_call.1} parent=11 // pred_fallthru
          _
      $region12: #{tpu_custom_call.1} parent=5 // pred_fallthru
        _
      %p130 = scmp.lt.s32.totalorder %s15, 2
      // Predicated region
      $region21: #{tpu_custom_call.1} parent=5 // pred_check
        %p131 = pneg %p130
      $region22: #{tpu_custom_call.1} parent=5 // pred_check_branch
        %133 = sbr.rel (%p131) target = $region24
      $region23: #{tpu_custom_call.1} parent=5 // pred_region
        // Predicated region
        $region25: #{tpu_custom_call.1} parent=23 // pred_check
          %p134 = pneg %p35
        $region26: #{tpu_custom_call.1} parent=23 // pred_check_branch
          %136 = sbr.rel (%p134) target = $region28
        $region27: #{tpu_custom_call.1} parent=23 // pred_region
          %s137 = sand.u32 %s25, 1
          %s138 = scalar_lea.sflag [#allocation3], %s137
          %s139 = sand.u32 %s25, 1
          %s140 = smul.addr %s139, 8
          %s141 = scalar_lea.vmem [#allocation2], %s140
          %143 = vsyncadd %s138, 0
          %s144 = smul.addr %s15, 2
          %s145 = smul.addr %s144, 4
          %s146 = scalar_lea.hbm %s0, %s145
          %s148 = sshll.u32 %s146, 4
          %s149 = int_to_ptr.hbm [resolvable:$true] %s148
          %s150 = sshll.u32 %s141, 4
          %s151 = int_to_ptr.vmem [resolvable:$true] %s150
          %153 = dma.hbm_to_vmem [thread:$0]  %s149, 128, %s151, %s138
        $region28: #{tpu_custom_call.1} parent=23 // pred_fallthru
          _
      $region24: #{tpu_custom_call.1} parent=5 // pred_fallthru
        _
      %p154 = scmp.le.s32.totalorder 1, %s15
      %p155 = scmp.lt.s32.totalorder %s15, 3
      %p156 = pnand %p154, %p155
      %p157 = pneg %p156
      // Predicated region
      $region29: #{tpu_custom_call.1} parent=5 // pred_check
        _
      $region30: #{tpu_custom_call.1} parent=5 // pred_check_branch
        %159 = sbr.rel (%p156) target = $region32
      $region31: #{tpu_custom_call.1} parent=5 // pred_region
        %s160 = ssub.s32 %s15, 1
        %s161 = sand.u32 %s28, 1
        %s162 = scalar_lea.sflag [#allocation3], %s161
        %s163 = sand.u32 %s28, 1
        %s164 = smul.addr %s163, 8
        %s165 = scalar_lea.vmem [#allocation2], %s164
        // Predicated region
        $region33: #{tpu_custom_call.1} parent=31 // pred_check
          %p166 = pneg %p41
        $region34: #{tpu_custom_call.1} parent=31 // pred_check_branch
          %168 = sbr.rel (%p166) target = $region36
        $region35: #{tpu_custom_call.1} parent=31 // pred_region
          %170 = dma.done %s162, 128
        $region36: #{tpu_custom_call.1} parent=31 // pred_fallthru
          _
        %s171 = sand.u32 %s28, 1
        %s172 = scalar_lea.sflag [#allocation3], %s171
        %s173 = sand.u32 %s28, 1
        %s174 = smul.addr %s173, 8
        %s175 = scalar_lea.vmem [#allocation2], %s174
        %p176 = pneg %p41
        %p177 = pneg %p38
        %p178 = pneg %p62
        %p179 = pneg %p59
        %p180 = pneg %p83
        %p181 = pneg %p80
        %p182 = pneg %p109
        %p183 = pneg %p106
        %s184 = sand.u32 %s96, 1
        %s185 = scalar_lea.sflag [#allocation4], %s184
        %s186 = sand.u32 %s96, 1
        %s187 = smul.addr %s186, 8
        %s188 = scalar_lea.vmem [#allocation5], %s187
        %v189 = vld [vmem:[%s165] sm:$0xff]
        %191 = vst [vmem:[#allocation1] ss:$2 sm:$0xff] %v189
        %v192 = vld.sshfl [vmem:[#allocation1] sm:$0xff pattern:$0x75316420]
        %v193 = vld.sshfl [vmem:[#allocation1 + $0x8] sm:$0xff pattern:$0x75316420]
        %vm196 = vcmask 1043456
        %v197 = vsel %vm196, %v192, 0.0
        %v198 = vsel %vm196, %v193, 0.0
        %v199 = vadd.f32 %v197, %v198
        %200 = vadd.xlane.f32.xlu0 %v199
        %v201 = vpop.xlane.xlu0 %200
        %v202 = vrot.slane %v201, 4
        %v203 = vadd.f32 %v201, %v202
        %v204 = vrot.slane %v203, 2
        %v205 = vadd.f32 %v203, %v204
        %v206 = vrot.slane %v205, 1
        %v207 = vadd.f32 %v205, %v206
        %s208 = vtos %v207
        %v209 = vstv %s208
        %v210 = vmul.f32 %v189, %v189
        %212 = vst [vmem:[#allocation1] ss:$2 sm:$0xff] %v210
        %v213 = vld.sshfl [vmem:[#allocation1] sm:$0xff pattern:$0x75316420]
        %v214 = vld.sshfl [vmem:[#allocation1 + $0x8] sm:$0xff pattern:$0x75316420]
        %v217 = vsel %vm196, %v213, 0.0
        %v218 = vsel %vm196, %v214, 0.0
        %v219 = vadd.f32 %v217, %v218
        %220 = vadd.xlane.f32.xlu0 %v219
        %v221 = vpop.xlane.xlu0 %220
        %v222 = vrot.slane %v221, 4
        %v223 = vadd.f32 %v221, %v222
        %v224 = vrot.slane %v223, 2
        %v225 = vadd.f32 %v223, %v224
        %v226 = vrot.slane %v225, 1
        %v227 = vadd.f32 %v225, %v226
        %s228 = vtos %v227
        %v229 = vstv %s228
        %v230 = vmul.f32 %v209, 0.0009765625
        %v231 = vmul.f32 %v230, 1024.0
        %v232 = vmul.f32 %v231, %v230
        %v233 = vsub.f32 %v229, %v232
        %v234 = vmul.f32 %v233, 0.0009775171
        %v235 = vmax.f32 %v234, 0.0
        %v236 = vrsqrt.pop %v235
        %v237 = vmul.f32 %v236, %v235
        %v238 = vmul.f32 %v237, %v236
        %v239 = vmul.f32 0.5, %v238
        %v240 = vsub.f32 1.5, %v239
        %v241 = vmul.f32 %v236, %v240
        %v242 = vmul.f32 %v235, %v241
        %vm243 = vcmp.eq.f32.partialorder %v235, inf
        %v244 = vsel %vm243, %v235, %v242
        %vm245 = vcmp.eq.f32.partialorder %v235, 0.0
        %v246 = vand.u32 %v235, 2147483648
        %v247 = vsel %vm245, %v246, %v244
        %v248 = vadd.f32 %v247, 1e-05
        %v249 = vrcp.pop %v248
        %v250 = vmul.f32 %v248, %v249
        %v251 = vsub.f32 1.0, %v250
        %v252 = vmul.f32 %v249, %v251
        %v253 = vadd.f32 %v249, %v252
        %vm254 = vweird.f32 %v248
        %vm255 = vweird.f32 %v249
        %vm256 = vmor %vm254, %vm255
        %v257 = vsel %vm256, %v249, %v253
        %v258 = vand.u32 2147483647, %v248
        %vm259 = vcmp.eq.f32.partialorder %v258, 8.507059e+37
        %v260 = vand.u32 %v248, 2147483648
        %v261 = vor.u32 1.1754944e-38, %v260
        %v262 = vsel %vm259, %v261, %v257
        %v263 = vld [vmem:[%s1] sm:$0xf]
        %v264 = vmul.f32 %v263, %v262
        %v265 = vld [vmem:[%s2] sm:$0xf]
        %v266 = vmul.f32 %v230, %v264
        %v267 = vsub.f32 %v265, %v266
        %269 = vset.pattern.permute.xlu0 0
        %270 = vperm.xlu0 %269, %v264
        %v271 = vpop.permute.xlu0 %270
        %v273 = vunpack.c.l.s4 839922192
        %v274 = vunpack.c.0.s8 %v273
        %v275 = vperm.slane %v271, %v274
        %v277 = vmul.f32 %v189, %v275
        %279 = vset.pattern.permute.xlu0 0
        %280 = vperm.xlu0 %279, %v267
        %v281 = vpop.permute.xlu0 %280
        %v283 = vunpack.c.l.s4 839922192
        %v284 = vunpack.c.0.s8 %v283
        %v285 = vperm.slane %v281, %v284
        %v287 = vadd.f32 %v277, %v285
        %288 = vst [vmem:[%s188] sm:$0xff] %v287
        %s289 = sand.u32 %s96, 1
        %s290 = scalar_lea.sflag [#allocation4], %s289
        %s291 = sand.u32 %s96, 1
        %s292 = smul.addr %s291, 8
        %s293 = scalar_lea.vmem [#allocation5], %s292
        // Predicated region
        $region37: #{tpu_custom_call.1} parent=31 // pred_check
          %p294 = pneg %p106
        $region38: #{tpu_custom_call.1} parent=31 // pred_check_branch
          %296 = sbr.rel (%p294) target = $region40
        $region39: #{tpu_custom_call.1} parent=31 // pred_region
          %298 = vsyncadd %s290, 0
          %s299 = smul.addr %s20, 2
          %s300 = smul.addr %s299, 4
          %s301 = scalar_lea.hbm %s3, %s300
          %s303 = sshll.u32 %s293, 4
          %s304 = int_to_ptr.vmem [resolvable:$true] %s303
          %s305 = sshll.u32 %s301, 4
          %s306 = int_to_ptr.hbm [resolvable:$true] %s305
          %308 = dma.vmem_to_hbm [thread:$0]  %s304, 128, %s306, %s290
        $region40: #{tpu_custom_call.1} parent=31 // pred_fallthru
          _
      $region32: #{tpu_custom_call.1} parent=5 // pred_fallthru
        _
      %p309 = scmp.le.s32.totalorder 2, %s15
      // Predicated region
      $region41: #{tpu_custom_call.1} parent=5 // pred_check
        %p310 = pneg %p309
      $region42: #{tpu_custom_call.1} parent=5 // pred_check_branch
        %312 = sbr.rel (%p310) target = $region44
      $region43: #{tpu_custom_call.1} parent=5 // pred_region
        %s313 = ssub.s32 %s15, 2
        // Predicated region
        $region45: #{tpu_custom_call.1} parent=43 // pred_check
          %p314 = pneg %p112
        $region46: #{tpu_custom_call.1} parent=43 // pred_check_branch
          %316 = sbr.rel (%p314) target = $region48
        $region47: #{tpu_custom_call.1} parent=43 // pred_region
          %s317 = sand.u32 %s97, 1
          %s318 = scalar_lea.sflag [#allocation4], %s317
          %s319 = sand.u32 %s97, 1
          %s320 = smul.addr %s319, 8
          %s321 = scalar_lea.vmem [#allocation5], %s320
          %323 = dma.done %s318, 128
        $region48: #{tpu_custom_call.1} parent=43 // pred_fallthru
          _
      $region44: #{tpu_custom_call.1} parent=5 // pred_fallthru
        _
    $region6: #{tpu_custom_call.1} parent=1 // loop_footer
      %s19 = sadd.s32 1, %s15
    $region7: #{tpu_custom_call.1} parent=1 // loop_footer_branch
      %14 = sbr.rel target = $region3
    $region8: #{tpu_custom_call.1} parent=1 // loop_exit
      _
    %324 = vsyncpa [#allocation3], 1
    %s325 = scalar_lea.sflag [#allocation3], 1
    %326 = vsyncpa %s325, 1
    %327 = vsyncpa [#allocation4], 1
    %s328 = scalar_lea.sflag [#allocation4], 1
    %329 = vsyncpa %s328, 1

</llo_original>
